<compile_context>
chip_gen: v7x
topology: tpu7x:2x2x1
jax: 0.10.0
libtpu: 0.0.40
codegen_flags: <defaults>
</compile_context>

<pallas_src>
from functools import partial

import jax
import jax.numpy as jnp
from jax.experimental import pallas as pl
from jax.experimental.pallas import tpu as pltpu


def _round_up(v, m):
    return (v + m - 1) // m * m


def _cross_kernel_mxu(bl_ref, x_ref, wm_ref, b_ref, o_ref, *, num_layers):
    # Fused dot + broadcast per layer via one (lane_w, lane_w) MXU matmul.
    # bl_ref: SMEM (L,)                 per-layer scalar linear bias
    # x_ref : VMEM (tb, lane_w)         lane-packed input tile
    # wm_ref: VMEM (L, lane_w, lane_w)  block-diagonal dot+broadcast matrices
    # b_ref : VMEM (L, lane_w)          per-feature cross bias (tiled over pack)
    # o_ref : VMEM (tb, lane_w)
    x0 = x_ref[...].astype(jnp.float32)
    bc = b_ref[...].astype(jnp.float32)          # small (L, lane_w): hoisted
    x = x0
    for i in range(num_layers):                  # statically unrolled, L small
        w_i = wm_ref[i]
        # Optional bf16 operands (wrapper stores wmat in bf16): 3x fewer MXU
        # passes than f32 on v5e; accumulation stays f32.
        lhs = x if w_i.dtype == jnp.float32 else x.astype(w_i.dtype)
        xw = jnp.dot(lhs, w_i, preferred_element_type=jnp.float32)
        x = x0 * (xw + bl_ref[i]) + bc[i] + x
    o_ref[...] = x.astype(o_ref.dtype)


def _cross_kernel_vpu(bl_ref, x_ref, w_ref, b_ref, o_ref, *, num_layers):
    # Fallback for very large D (broadcast matrix would not fit VMEM):
    # VPU multiply + lane reduction, no MXU.
    # bl_ref: SMEM (L,); x_ref: VMEM (tb, D); w_ref: VMEM (L, D); b_ref: VMEM (L, D)
    x0 = x_ref[...].astype(jnp.float32)
    wf = w_ref[...].astype(jnp.float32)          # hoisted
    bc = b_ref[...].astype(jnp.float32)          # hoisted
    x = x0
    for i in range(num_layers):                  # statically unrolled
        xw = jnp.sum(x * wf[i], axis=-1, keepdims=True) + bl_ref[i]   # (tb, 1)
        x = x0 * xw + bc[i] + x
    o_ref[...] = x.astype(o_ref.dtype)


_MXU_MAX_LANE_W = 512   # above this the (L, lane_w, lane_w) matrices get too big


def cross_network(x, w, b_lin, b_cross, *, tile_rows=4096, mxu_bf16=False):
    """DCN cross stack. x: (B, D); w: (L, D); b_lin: (L,); b_cross: (L, D)."""
    B, D = x.shape
    L = w.shape[0]
    f32 = jnp.float32
    in_dtype = x.dtype
    esz = jnp.dtype(in_dtype).itemsize
    sub = {4: 8, 2: 16, 1: 32}.get(esz, 8)       # sublane tile for input dtype

    # ---- feature packing / padding (lane-dense layout) ---------------------
    # D < 128: zero-pad D to the next power-of-two divisor of 128 and pack
    # k = 128 // Dp batch rows per 128-wide lane row.  Padded weight / bias
    # entries are zero, so padded lanes stay exactly zero (results exact).
    if D < 128:
        Dp = 1
        while Dp < D:
            Dp *= 2
        k = 128 // Dp
    else:
        Dp = D
        k = 1
    lane_w = k * Dp
    use_mxu = lane_w <= _MXU_MAX_LANE_W

    wp = w.astype(f32)
    bcp = b_cross.astype(f32)
    if Dp != D:
        wp = jnp.pad(wp, ((0, 0), (0, Dp - D)))
        bcp = jnp.pad(bcp, ((0, 0), (0, Dp - D)))

    # ---- batch padding ------------------------------------------------------
    # Pad only to a multiple of k * sub (lane packing + sublane tile); the
    # ragged last grid block is handled by Pallas (rows are independent, tail
    # reads are garbage but their writes are masked).
    Bp = _round_up(B, k * sub)
    if Bp != B or Dp != D:
        x_in = jnp.pad(x, ((0, Bp - B), (0, Dp - D)))
    else:
        x_in = x
    rows = Bp // k
    xp = x_in.reshape(rows, lane_w)              # free row-major reshape

    # ---- tile sizing (mem-bound: as large as VMEM comfortably allows) ------
    w_dtype = jnp.bfloat16 if (use_mxu and mxu_bf16) else f32
    if use_mxu:
        w_arg_bytes = L * lane_w * lane_w * jnp.dtype(w_dtype).itemsize
    else:
        w_arg_bytes = L * lane_w * 4
    bias_bytes = L * lane_w * 4

    # Per packed row: double-buffered in + out tiles (input dtype) plus ~4
    # live f32 tile temporaries of the unrolled layer chain (x0, x, xw, out).
    bytes_per_row = lane_w * esz * 4 + lane_w * 4 * 4
    tile_budget = 24 * 1024 * 1024               # leaves headroom on v7x (64 MiB)
    max_tb = max(sub, (tile_budget // bytes_per_row) // sub * sub)
    tb = min(_round_up(tile_rows, sub), max_tb, rows)
    # Keep grid >= 2 when there is enough work so both v7x TensorCores are fed.
    if rows >= 2 * sub:
        tb = min(tb, _round_up(pl.cdiv(rows, 2), sub))
    tb = max(sub, tb // sub * sub)
    grid = (pl.cdiv(rows, tb),)

    est = bytes_per_row * tb + 2 * (w_arg_bytes + bias_bytes) + (2 << 20)
    vmem_limit = int(min(48 * 1024 * 1024, max(2 * est, 16 * 1024 * 1024)))

    # ---- per-layer dot + broadcast matrices ---------------------------------
    #   wmat[l, i*Dp + a, j*Dp + b] = w[l, a] * (i == j)
    if use_mxu:
        eye = jnp.eye(k, dtype=f32)
        blk = jnp.broadcast_to(wp[:, :, None], (L, Dp, Dp))
        wmat = jnp.einsum('ij,lab->liajb', eye, blk).reshape(L, lane_w, lane_w)
        w_arg = wmat.astype(w_dtype)
        kernel = partial(_cross_kernel_mxu, num_layers=L)
        w_spec = pl.BlockSpec((L, lane_w, lane_w), lambda i: (0, 0, 0))
    else:
        w_arg = wp                                # (L, D), resident
        kernel = partial(_cross_kernel_vpu, num_layers=L)
        w_spec = pl.BlockSpec((L, lane_w), lambda i: (0, 0))

    b_tiled = jnp.tile(bcp, (1, k))               # (L, lane_w)

    out = pl.pallas_call(
        kernel,
        out_shape=jax.ShapeDtypeStruct((rows, lane_w), in_dtype),
        grid_spec=pltpu.PrefetchScalarGridSpec(
            num_scalar_prefetch=0,
            grid=grid,
            in_specs=[
                pl.BlockSpec(memory_space=pltpu.SMEM),          # b_lin (L,)
                pl.BlockSpec((tb, lane_w), lambda i: (i, 0)),   # x tile
                w_spec,                                         # resident weights
                pl.BlockSpec((L, lane_w), lambda i: (0, 0)),    # cross bias
            ],
            out_specs=pl.BlockSpec((tb, lane_w), lambda i: (i, 0)),
        ),
        compiler_params=pltpu.CompilerParams(
            dimension_semantics=("parallel",),
            vmem_limit_bytes=vmem_limit,
        ),
    )(b_lin.astype(f32), xp, w_arg, b_tiled)

    out = out.reshape(rows * k, Dp)
    if Bp != B:
        out = out[:B]
    if Dp != D:
        out = out[:, :D]
    return out


def cross_network_ref(x, w, b_lin, b_cross):
    # Pure f32 VPU reference (no MXU precision ambiguity).
    x0 = x
    out = x
    for i in range(w.shape[0]):
        xw = jnp.sum(out * w[i], axis=-1, keepdims=True) + b_lin[i]   # (B, 1)
        out = x0 * xw + b_cross[i] + out
    return out


if __name__ == "__main__":
    key = jax.random.PRNGKey(0)
    L = 3

    # 1) Module-sized case: input_dim=32, num_layers=3 (packed MXU path, k=4).
    B, D = 16, 32
    k_x, k_w, k_bl = jax.random.split(key, 3)
    x = jax.random.normal(k_x, (B, D), dtype=jnp.float32)
    w = jax.random.normal(k_w, (L, D), dtype=jnp.float32) * 0.1      # nn.Linear(D,1) weights
    b_lin = jax.random.normal(k_bl, (L,), dtype=jnp.float32) * 0.1   # nn.Linear(D,1) biases
    b_cross = jnp.zeros((L, D), dtype=jnp.float32)                   # module init: zeros

    out = jax.block_until_ready(cross_network(x, w, b_lin, b_cross))
    ref = cross_network_ref(x, w, b_lin, b_cross)
    assert jnp.allclose(out, ref, atol=1e-4, rtol=1e-4), "mismatch (packed MXU path)"

    # 2) D = 128, ragged batch (broadcast-matmul path, k=1, ragged tail block).
    B2, D2 = 20, 128
    k_x2, k_w2, k_bl2, k_bc2 = jax.random.split(jax.random.PRNGKey(1), 4)
    x2 = jax.random.normal(k_x2, (B2, D2), dtype=jnp.float32)
    w2 = jax.random.normal(k_w2, (L, D2), dtype=jnp.float32) * 0.1
    bl2 = jax.random.normal(k_bl2, (L,), dtype=jnp.float32) * 0.1
    bc2 = jax.random.normal(k_bc2, (L, D2), dtype=jnp.float32) * 0.1
    out2 = jax.block_until_ready(cross_network(x2, w2, bl2, bc2))
    ref2 = cross_network_ref(x2, w2, bl2, bc2)
    assert jnp.allclose(out2, ref2, atol=1e-4, rtol=1e-4), "mismatch (D=128 path)"

    # 3) D = 48 (128 % D != 0): feature zero-pad to Dp=64, still lane-dense.
    B3, D3 = 10, 48
    k_x3, k_w3, k_bl3, k_bc3 = jax.random.split(jax.random.PRNGKey(2), 4)
    x3 = jax.random.normal(k_x3, (B3, D3), dtype=jnp.float32)
    w3 = jax.random.normal(k_w3, (L, D3), dtype=jnp.float32) * 0.1
    bl3 = jax.random.normal(k_bl3, (L,), dtype=jnp.float32) * 0.1
    bc3 = jax.random.normal(k_bc3, (L, D3), dtype=jnp.float32) * 0.1
    out3 = jax.block_until_ready(cross_network(x3, w3, bl3, bc3))
    ref3 = cross_network_ref(x3, w3, bl3, bc3)
    assert jnp.allclose(out3, ref3, atol=1e-4, rtol=1e-4), "mismatch (padded-D path)"

    # 4) Large D (> 512): VPU-reduction fallback.
    B4, D4, L4 = 12, 640, 2
    k_x4, k_w4, k_bl4, k_bc4 = jax.random.split(jax.random.PRNGKey(3), 4)
    x4 = jax.random.normal(k_x4, (B4, D4), dtype=jnp.float32)
    w4 = jax.random.normal(k_w4, (L4, D4), dtype=jnp.float32) * 0.05
    bl4 = jax.random.normal(k_bl4, (L4,), dtype=jnp.float32) * 0.1
    bc4 = jax.random.normal(k_bc4, (L4, D4), dtype=jnp.float32) * 0.1
    out4 = jax.block_until_ready(cross_network(x4, w4, bl4, bc4))
    ref4 = cross_network_ref(x4, w4, bl4, bc4)
    assert jnp.allclose(out4, ref4, atol=1e-4, rtol=1e-4), "mismatch (VPU path)"

    # 5) bf16 inputs: exercises (16, 128) sublane tiling / dtype-aware sizing.
    x5 = jax.random.normal(jax.random.PRNGKey(4), (64, D), dtype=jnp.float32
                           ).astype(jnp.bfloat16)
    out5 = jax.block_until_ready(cross_network(x5, w, b_lin, b_cross))
    ref5 = cross_network_ref(x5.astype(jnp.float32), w, b_lin, b_cross)
    assert out5.dtype == jnp.bfloat16
    assert jnp.allclose(out5.astype(jnp.float32), ref5, atol=3e-2, rtol=3e-2), \
        "mismatch (bf16 input path)"

    # 6) Optional bf16 MXU operands (v5e-friendly): smoke test, loose bound.
    out6 = jax.block_until_ready(cross_network(x, w, b_lin, b_cross, mxu_bf16=True))
    assert bool(jnp.all(jnp.isfinite(out6)))
    assert float(jnp.max(jnp.abs(out6 - ref))) < 0.5, "mxu_bf16 path diverged"

    print("KERNEL_OK")
</pallas_src>

<mosaic_0001>
module attributes {stable_mosaic.version = 11 : i64} {
  func.func @_cross_kernel_mxu(%arg0: i32, %arg1: memref<3xf32, #tpu.memory_space<smem>>, %arg2: memref<8x128xf32, #tpu.memory_space<vmem>>, %arg3: memref<3x128x128xf32, #tpu.memory_space<vmem>>, %arg4: memref<3x128xf32, #tpu.memory_space<vmem>>, %arg5: memref<8x128xf32, #tpu.memory_space<vmem>>) attributes {dimension_semantics = [#tpu.dimension_semantics<parallel>], iteration_bounds = array<i64: 1>, scalar_prefetch = 0 : i64, scratch_operands = 0 : i64, tpu.core_type = #tpu.core_type<tc>, window_params = [{transform_indices = @transform_0, window_bounds = array<i64: 3>}, {transform_indices = @transform_1, window_bounds = array<i64: 8, 128>}, {pipeline_mode = #tpu.pipeline_mode<synchronous>, transform_indices = @transform_2, window_bounds = array<i64: 3, 128, 128>}, {pipeline_mode = #tpu.pipeline_mode<synchronous>, transform_indices = @transform_3, window_bounds = array<i64: 3, 128>}, {transform_indices = @transform_4, window_bounds = array<i64: 8, 128>}]} {
    %c0 = arith.constant 0 : index
    %c0_0 = arith.constant 0 : index
    %0 = vector.load %arg2[%c0, %c0_0] : memref<8x128xf32, #tpu.memory_space<vmem>>, vector<8x128xf32>
    %c0_1 = arith.constant 0 : index
    %c0_2 = arith.constant 0 : index
    %1 = vector.load %arg4[%c0_1, %c0_2] : memref<3x128xf32, #tpu.memory_space<vmem>>, vector<3x128xf32>
    %c0_3 = arith.constant 0 : index
    %c0_4 = arith.constant 0 : index
    %c0_5 = arith.constant 0 : index
    %2 = vector.load %arg3[%c0_3, %c0_4, %c0_5] : memref<3x128x128xf32, #tpu.memory_space<vmem>>, vector<1x128x128xf32>
    %3 = vector.shape_cast %2 : vector<1x128x128xf32> to vector<128x128xf32>
    %cst = arith.constant dense<0.000000e+00> : vector<8x128xf32>
    %4 = tpu.matmul %0, %3, %cst {dimension_numbers = #tpu.dot_dimension_numbers<[1], [0], [0], [1], [0, 0, 1, 1], [], []>} : vector<8x128xf32>, vector<128x128xf32>, vector<8x128xf32> -> vector<8x128xf32>
    %c0_6 = arith.constant 0 : index
    %5 = memref.load %arg1[%c0_6] : memref<3xf32, #tpu.memory_space<smem>>
    %6 = vector.broadcast %5 : f32 to vector<8x128xf32>
    %7 = arith.addf %4, %6 : vector<8x128xf32>
    %8 = arith.mulf %0, %7 : vector<8x128xf32>
    %9 = vector.extract_strided_slice %1 {offsets = [0, 0], sizes = [1, 128], strides = [1, 1]} : vector<3x128xf32> to vector<1x128xf32>
    %10 = vector.shape_cast %9 : vector<1x128xf32> to vector<128xf32>
    %11 = vector.shape_cast %10 : vector<128xf32> to vector<1x128xf32>
    %12 = vector.broadcast %11 : vector<1x128xf32> to vector<8x128xf32>
    %13 = arith.addf %8, %12 : vector<8x128xf32>
    %14 = arith.addf %13, %0 : vector<8x128xf32>
    %c1 = arith.constant 1 : index
    %c0_7 = arith.constant 0 : index
    %c0_8 = arith.constant 0 : index
    %15 = vector.load %arg3[%c1, %c0_7, %c0_8] : memref<3x128x128xf32, #tpu.memory_space<vmem>>, vector<1x128x128xf32>
    %16 = vector.shape_cast %15 : vector<1x128x128xf32> to vector<128x128xf32>
    %cst_9 = arith.constant dense<0.000000e+00> : vector<8x128xf32>
    %17 = tpu.matmul %14, %16, %cst_9 {dimension_numbers = #tpu.dot_dimension_numbers<[1], [0], [0], [1], [0, 0, 1, 1], [], []>} : vector<8x128xf32>, vector<128x128xf32>, vector<8x128xf32> -> vector<8x128xf32>
    %c1_10 = arith.constant 1 : index
    %18 = memref.load %arg1[%c1_10] : memref<3xf32, #tpu.memory_space<smem>>
    %19 = vector.broadcast %18 : f32 to vector<8x128xf32>
    %20 = arith.addf %17, %19 : vector<8x128xf32>
    %21 = arith.mulf %0, %20 : vector<8x128xf32>
    %22 = vector.extract_strided_slice %1 {offsets = [1, 0], sizes = [1, 128], strides = [1, 1]} : vector<3x128xf32> to vector<1x128xf32>
    %23 = vector.shape_cast %22 : vector<1x128xf32> to vector<128xf32>
    %24 = vector.shape_cast %23 : vector<128xf32> to vector<1x128xf32>
    %25 = vector.broadcast %24 : vector<1x128xf32> to vector<8x128xf32>
    %26 = arith.addf %21, %25 : vector<8x128xf32>
    %27 = arith.addf %26, %14 : vector<8x128xf32>
    %c2 = arith.constant 2 : index
    %c0_11 = arith.constant 0 : index
    %c0_12 = arith.constant 0 : index
    %28 = vector.load %arg3[%c2, %c0_11, %c0_12] : memref<3x128x128xf32, #tpu.memory_space<vmem>>, vector<1x128x128xf32>
    %29 = vector.shape_cast %28 : vector<1x128x128xf32> to vector<128x128xf32>
    %cst_13 = arith.constant dense<0.000000e+00> : vector<8x128xf32>
    %30 = tpu.matmul %27, %29, %cst_13 {dimension_numbers = #tpu.dot_dimension_numbers<[1], [0], [0], [1], [0, 0, 1, 1], [], []>} : vector<8x128xf32>, vector<128x128xf32>, vector<8x128xf32> -> vector<8x128xf32>
    %c2_14 = arith.constant 2 : index
    %31 = memref.load %arg1[%c2_14] : memref<3xf32, #tpu.memory_space<smem>>
    %32 = vector.broadcast %31 : f32 to vector<8x128xf32>
    %33 = arith.addf %30, %32 : vector<8x128xf32>
    %34 = arith.mulf %0, %33 : vector<8x128xf32>
    %35 = vector.extract_strided_slice %1 {offsets = [2, 0], sizes = [1, 128], strides = [1, 1]} : vector<3x128xf32> to vector<1x128xf32>
    %36 = vector.shape_cast %35 : vector<1x128xf32> to vector<128xf32>
    %37 = vector.shape_cast %36 : vector<128xf32> to vector<1x128xf32>
    %38 = vector.broadcast %37 : vector<1x128xf32> to vector<8x128xf32>
    %39 = arith.addf %34, %38 : vector<8x128xf32>
    %40 = arith.addf %39, %27 : vector<8x128xf32>
    %c0_15 = arith.constant 0 : index
    %c0_16 = arith.constant 0 : index
    %41 = vector.load %arg5[%c0_15, %c0_16] : memref<8x128xf32, #tpu.memory_space<vmem>>, vector<8x128xf32>
    tpu.vector_store %arg5[%c0_15, %c0_16], %40 {strides = array<i32>} : memref<8x128xf32, #tpu.memory_space<vmem>>, vector<8x128xf32>,
    return
  }
  func.func @transform_0(%arg0: i32) -> i32 {
    %c0_i32 = arith.constant 0 : i32
    %c0_i32_0 = arith.constant 0 : i32
    return %c0_i32 : i32
  }
  func.func @transform_1(%arg0: i32) -> (i32, i32) {
    %c0_i32 = arith.constant 0 : i32
    %c0_i32_0 = arith.constant 0 : i32
    return %arg0, %c0_i32 : i32, i32
  }
  func.func @transform_2(%arg0: i32) -> (i32, i32, i32) {
    %c0_i32 = arith.constant 0 : i32
    %c0_i32_0 = arith.constant 0 : i32
    %c0_i32_1 = arith.constant 0 : i32
    %c0_i32_2 = arith.constant 0 : i32
    return %c0_i32, %c0_i32_0, %c0_i32_1 : i32, i32, i32
  }
  func.func @transform_3(%arg0: i32) -> (i32, i32) {
    %c0_i32 = arith.constant 0 : i32
    %c0_i32_0 = arith.constant 0 : i32
    %c0_i32_1 = arith.constant 0 : i32
    return %c0_i32, %c0_i32_0 : i32, i32
  }
  func.func @transform_4(%arg0: i32) -> (i32, i32) {
    %c0_i32 = arith.constant 0 : i32
    %c0_i32_0 = arith.constant 0 : i32
    return %arg0, %c0_i32 : i32, i32
  }
}

</mosaic_0001>

<llo_original>
// kernel: tpu_custom_call.1
$region0: #{tpu_custom_call.1}
  #allocation0 [shape = 'u32[]', space=smem, size = 0x4, offset = 0x4, fixed_abs, tag = 'smem constant byte address 0x4 - core index']
  #allocation1 [shape = 'u32[144,128]{1,0:T(1,128)}', space=vmem, size = 0x12000, scoped, tag = 'internal scratch']
  %s0 = inlined_call_operand.hbm [shape: f32[3], index: 0, kind: input, shape index: {}]
  %s1 = inlined_call_operand.hbm [shape: f32[8,128], index: 1, kind: input, shape index: {}]
  %s2 = inlined_call_operand.hbm [shape: f32[3,128,128], index: 2, kind: input, shape index: {}]
  %s3 = inlined_call_operand.vmem [shape: f32[3,128], index: 3, kind: input, shape index: {}]
  %s4 = inlined_call_operand.hbm [shape: f32[8,128], index: 4, kind: output, shape index: {}]
  %s5 = sld [smem:[#allocation0]]
  $region38: #{tpu_custom_call.1} parent=0
    _
  %s7 = ssub.s32 1, %s5
  %s8 = scalar_select 0, %s7, %s5
  $region1: #{tpu_custom_call.1} parent=0
    #allocation2 [shape = 'u8[512]{0}', space=smem, size = 0x200, scoped, tag = 'input window, operand 0, single buffered']
    #allocation3 [shape = 's32[1]{0}', space=sflag, size = 0x4, scoped, tag = 'scoped memory for tpu_custom_call.1']
    #allocation4 [shape = 's32[1]{0}', space=sflag, size = 0x4, scoped, tag = 'scoped memory for tpu_custom_call.1']
    #allocation5 [shape = 's32[1]{0}', space=sflag, size = 0x4, scoped, tag = 'scoped memory for tpu_custom_call.1']
    #allocation6 [shape = 'u8[4096]{0}', space=vmem, size = 0x1000, scoped, tag = 'input window, operand 1, single buffered']
    #allocation7 [shape = 'u8[196608]{0}', space=vmem, size = 0x30000, scoped, tag = 'input window, operand 2, single buffered']
    #allocation8 [shape = 's32[1]{0}', space=sflag, size = 0x4, scoped, tag = 'scoped memory for tpu_custom_call.1']
    #allocation9 [shape = 'u8[4096]{0}', space=vmem, size = 0x1000, scoped, tag = 'output window, operand 0, single buffered']
    %9 = vsyncpa [#allocation5], 0
    %10 = vsyncpa [#allocation3], 0
    %11 = vsyncpa [#allocation8], 0
    %12 = vsyncpa [#allocation4], 0
    // Predicated region
    $region2: #{tpu_custom_call.1} parent=1 // pred_check
      _
    $region3: #{tpu_custom_call.1} parent=1 // pred_check_branch
      %14 = sbr.rel (0) target = $region5
    $region4: #{tpu_custom_call.1} parent=1 // pred_region
      %s16 = ssub.s32 16, 16
      %17 = vsyncadd [#allocation5], %s16
      %20 = dma.hbm_to_smem %s0, 16, [#allocation2], [#allocation5]
    $region5: #{tpu_custom_call.1} parent=1 // pred_fallthru
      _
    // Predicated region
    $region6: #{tpu_custom_call.1} parent=1 // pred_check
      _
    $region7: #{tpu_custom_call.1} parent=1 // pred_check_branch
      %22 = sbr.rel (0) target = $region9
    $region8: #{tpu_custom_call.1} parent=1 // pred_region
      %s24 = ssub.s32 128, 128
      %25 = vsyncadd [#allocation3], %s24
      %s27 = sshll.u32 [#allocation6], 4
      %s28 = int_to_ptr.vmem [resolvable:$true] %s27
      %30 = dma.hbm_to_vmem [thread:$0]  %s1, 128, %s28, [#allocation3]
    $region9: #{tpu_custom_call.1} parent=1 // pred_fallthru
      _
    // Predicated region
    $region10: #{tpu_custom_call.1} parent=1 // pred_check
      _
    $region11: #{tpu_custom_call.1} parent=1 // pred_check_branch
      %32 = sbr.rel (0) target = $region13
    $region12: #{tpu_custom_call.1} parent=1 // pred_region
      %s34 = ssub.s32 6144, 6144
      %35 = vsyncadd [#allocation8], %s34
      %s36 = sshll.u32 [#allocation7], 4
      %s37 = int_to_ptr.vmem [resolvable:$true] %s36
      %42 = dma.hbm_to_vmem [thread:$0]  %s2, 6144, %s37, [#allocation8], 128, 128, 8
    $region13: #{tpu_custom_call.1} parent=1 // pred_fallthru
      _
    // Predicated region
    $region14: #{tpu_custom_call.1} parent=1 // pred_check
      _
    $region15: #{tpu_custom_call.1} parent=1 // pred_check_branch
      %44 = sbr.rel (0) target = $region17
    $region16: #{tpu_custom_call.1} parent=1 // pred_region
      _
    $region17: #{tpu_custom_call.1} parent=1 // pred_fallthru
      _
    // Predicated region
    $region18: #{tpu_custom_call.1} parent=1 // pred_check
      _
    $region19: #{tpu_custom_call.1} parent=1 // pred_check_branch
      %46 = sbr.rel (0) target = $region21
    $region20: #{tpu_custom_call.1} parent=1 // pred_region
      %47 = dma.done [#allocation5], 16
    $region21: #{tpu_custom_call.1} parent=1 // pred_fallthru
      _
    // Predicated region
    $region22: #{tpu_custom_call.1} parent=1 // pred_check
      _
    $region23: #{tpu_custom_call.1} parent=1 // pred_check_branch
      %49 = sbr.rel (0) target = $region25
    $region24: #{tpu_custom_call.1} parent=1 // pred_region
      %50 = dma.done [#allocation3], 128
    $region25: #{tpu_custom_call.1} parent=1 // pred_fallthru
      _
    // Predicated region
    $region26: #{tpu_custom_call.1} parent=1 // pred_check
      _
    $region27: #{tpu_custom_call.1} parent=1 // pred_check_branch
      %52 = sbr.rel (0) target = $region29
    $region28: #{tpu_custom_call.1} parent=1 // pred_region
      %53 = dma.done [#allocation8], 6144
    $region29: #{tpu_custom_call.1} parent=1 // pred_fallthru
      _
    %54 = sfence
    %v55 = vld [vmem:[#allocation6] sm:$0xff]
    %v56 = vld [vmem:[%s3] sm:$0x7]
    %v57 = vld [vmem:[#allocation7] sm:$0xff]
    %v58 = vld [vmem:[#allocation7 + $0x8] sm:$0xff]
    %v59 = vld [vmem:[#allocation7 + $0x10] sm:$0xff]
    %v60 = vld [vmem:[#allocation7 + $0x18] sm:$0xff]
    %v61 = vld [vmem:[#allocation7 + $0x20] sm:$0xff]
    %v62 = vld [vmem:[#allocation7 + $0x28] sm:$0xff]
    %v63 = vld [vmem:[#allocation7 + $0x30] sm:$0xff]
    %v64 = vld [vmem:[#allocation7 + $0x38] sm:$0xff]
    %v65 = vld [vmem:[#allocation7 + $0x40] sm:$0xff]
    %v66 = vld [vmem:[#allocation7 + $0x48] sm:$0xff]
    %v67 = vld [vmem:[#allocation7 + $0x50] sm:$0xff]
    %v68 = vld [vmem:[#allocation7 + $0x58] sm:$0xff]
    %v69 = vld [vmem:[#allocation7 + $0x60] sm:$0xff]
    %v70 = vld [vmem:[#allocation7 + $0x68] sm:$0xff]
    %v71 = vld [vmem:[#allocation7 + $0x70] sm:$0xff]
    %v72 = vld [vmem:[#allocation7 + $0x78] sm:$0xff]
    %s73 = sld [smem:[#allocation2]]
    %v74 = vstv %s73
    %75 = vmatprep.subr.mxu0 0.0
    %76 = vmatpush1.msra.mxu0 %v57
    %77 = vmatprep.subr.mxu0 0.0
    %78 = vmatpush1.msra.mxu0 %v58
    %79 = vmatprep.subr.mxu0 0.0
    %80 = vmatpush1.msra.mxu0 %v59
    %81 = vmatprep.subr.mxu0 0.0
    %82 = vmatpush1.msra.mxu0 %v60
    %83 = vmatprep.subr.mxu0 0.0
    %84 = vmatpush1.msra.mxu0 %v61
    %85 = vmatprep.subr.mxu0 0.0
    %86 = vmatpush1.msra.mxu0 %v62
    %87 = vmatprep.subr.mxu0 0.0
    %88 = vmatpush1.msra.mxu0 %v63
    %89 = vmatprep.subr.mxu0 0.0
    %90 = vmatpush1.msra.mxu0 %v64
    %91 = vmatprep.subr.mxu0 0.0
    %92 = vmatpush1.msra.mxu0 %v65
    %93 = vmatprep.subr.mxu0 0.0
    %94 = vmatpush1.msra.mxu0 %v66
    %95 = vmatprep.subr.mxu0 0.0
    %96 = vmatpush1.msra.mxu0 %v67
    %97 = vmatprep.subr.mxu0 0.0
    %98 = vmatpush1.msra.mxu0 %v68
    %99 = vmatprep.subr.mxu0 0.0
    %100 = vmatpush1.msra.mxu0 %v69
    %101 = vmatprep.subr.mxu0 0.0
    %102 = vmatpush1.msra.mxu0 %v70
    %103 = vmatprep.subr.mxu0 0.0
    %104 = vmatpush1.msra.mxu0 %v71
    %105 = vmatprep.subr.mxu0 0.0
    %106 = vmatpush1.msra.mxu0 %v72
    %107 = vmatprep.subr.mxu0 0.0
    %108 = vmatpush1.msra.mxu0 0.0
    %109 = vmatprep.subr.mxu0 0.0
    %110 = vmatpush1.msra.mxu0 0.0
    %111 = vmatprep.subr.mxu0 0.0
    %112 = vmatpush1.msra.mxu0 0.0
    %113 = vmatprep.subr.mxu0 0.0
    %114 = vmatpush1.msra.mxu0 0.0
    %115 = vmatprep.subr.mxu0 0.0
    %116 = vmatpush1.msra.mxu0 0.0
    %117 = vmatprep.subr.mxu0 0.0
    %118 = vmatpush1.msra.mxu0 0.0
    %119 = vmatprep.subr.mxu0 0.0
    %120 = vmatpush1.msra.mxu0 0.0
    %121 = vmatprep.subr.mxu0 0.0
    %122 = vmatpush1.msra.mxu0 0.0
    %123 = vmatprep.subr.mxu0 0.0
    %124 = vmatpush1.msra.mxu0 0.0
    %125 = vmatprep.subr.mxu0 0.0
    %126 = vmatpush1.msra.mxu0 0.0
    %127 = vmatprep.subr.mxu0 0.0
    %128 = vmatpush1.msra.mxu0 0.0
    %129 = vmatprep.subr.mxu0 0.0
    %130 = vmatpush1.msra.mxu0 0.0
    %131 = vmatprep.subr.mxu0 0.0
    %132 = vmatpush1.msra.mxu0 0.0
    %133 = vmatprep.subr.mxu0 0.0
    %134 = vmatpush1.msra.mxu0 0.0
    %135 = vmatprep.subr.mxu0 0.0
    %136 = vmatpush1.msra.mxu0 0.0
    %137 = vmatprep.subr.mxu0 0.0
    %138 = vmatpush1.msra.mxu0 0.0
    %139 = vmatprep.mubr.f32.mxu0 0.0
    %140 = vmatmul.mubr.f32.gmra.mrb[0].mxu0 %v55
    %v141 = vpop.f32.mrb[0].mxu0
    %v142 = vadd.f32 %v74, %v141
    %v143 = vpop.f32.mrb[0].mxu0
    %144 = vdwg.mxu0
    %v145 = vmul.f32 %v55, %v142
    %v146 = vlaneseq
    %v147 = vshrl.u32 %v146, 7
    %v148 = vsub.s32 0, %v147
    %v149 = vrot.slane %v56, %v148
    %v150 = vadd.f32 %v145, %v149
    %v151 = vadd.f32 %v150, %v55
    %s152 = scalar_lea.vmem [#allocation7], 128
    %v153 = vld [vmem:[%s152] sm:$0xff]
    %v154 = vld [vmem:[%s152 + $0x8] sm:$0xff]
    %v155 = vld [vmem:[%s152 + $0x10] sm:$0xff]
    %v156 = vld [vmem:[%s152 + $0x18] sm:$0xff]
    %v157 = vld [vmem:[%s152 + $0x20] sm:$0xff]
    %v158 = vld [vmem:[%s152 + $0x28] sm:$0xff]
    %v159 = vld [vmem:[%s152 + $0x30] sm:$0xff]
    %v160 = vld [vmem:[%s152 + $0x38] sm:$0xff]
    %v161 = vld [vmem:[%s152 + $0x40] sm:$0xff]
    %v162 = vld [vmem:[%s152 + $0x48] sm:$0xff]
    %v163 = vld [vmem:[%s152 + $0x50] sm:$0xff]
    %v164 = vld [vmem:[%s152 + $0x58] sm:$0xff]
    %v165 = vld [vmem:[%s152 + $0x60] sm:$0xff]
    %v166 = vld [vmem:[%s152 + $0x68] sm:$0xff]
    %v167 = vld [vmem:[%s152 + $0x70] sm:$0xff]
    %v168 = vld [vmem:[%s152 + $0x78] sm:$0xff]
    %s169 = sld [smem:[#allocation2 + $0x1]]
    %v170 = vstv %s169
    %171 = vmatprep.subr.mxu0 0.0
    %172 = vmatpush1.msra.mxu0 %v153
    %173 = vmatprep.subr.mxu0 0.0
    %174 = vmatpush1.msra.mxu0 %v154
    %175 = vmatprep.subr.mxu0 0.0
    %176 = vmatpush1.msra.mxu0 %v155
    %177 = vmatprep.subr.mxu0 0.0
    %178 = vmatpush1.msra.mxu0 %v156
    %179 = vmatprep.subr.mxu0 0.0
    %180 = vmatpush1.msra.mxu0 %v157
    %181 = vmatprep.subr.mxu0 0.0
    %182 = vmatpush1.msra.mxu0 %v158
    %183 = vmatprep.subr.mxu0 0.0
    %184 = vmatpush1.msra.mxu0 %v159
    %185 = vmatprep.subr.mxu0 0.0
    %186 = vmatpush1.msra.mxu0 %v160
    %187 = vmatprep.subr.mxu0 0.0
    %188 = vmatpush1.msra.mxu0 %v161
    %189 = vmatprep.subr.mxu0 0.0
    %190 = vmatpush1.msra.mxu0 %v162
    %191 = vmatprep.subr.mxu0 0.0
    %192 = vmatpush1.msra.mxu0 %v163
    %193 = vmatprep.subr.mxu0 0.0
    %194 = vmatpush1.msra.mxu0 %v164
    %195 = vmatprep.subr.mxu0 0.0
    %196 = vmatpush1.msra.mxu0 %v165
    %197 = vmatprep.subr.mxu0 0.0
    %198 = vmatpush1.msra.mxu0 %v166
    %199 = vmatprep.subr.mxu0 0.0
    %200 = vmatpush1.msra.mxu0 %v167
    %201 = vmatprep.subr.mxu0 0.0
    %202 = vmatpush1.msra.mxu0 %v168
    %203 = vmatprep.subr.mxu0 0.0
    %204 = vmatpush1.msra.mxu0 0.0
    %205 = vmatprep.subr.mxu0 0.0
    %206 = vmatpush1.msra.mxu0 0.0
    %207 = vmatprep.subr.mxu0 0.0
    %208 = vmatpush1.msra.mxu0 0.0
    %209 = vmatprep.subr.mxu0 0.0
    %210 = vmatpush1.msra.mxu0 0.0
    %211 = vmatprep.subr.mxu0 0.0
    %212 = vmatpush1.msra.mxu0 0.0
    %213 = vmatprep.subr.mxu0 0.0
    %214 = vmatpush1.msra.mxu0 0.0
    %215 = vmatprep.subr.mxu0 0.0
    %216 = vmatpush1.msra.mxu0 0.0
    %217 = vmatprep.subr.mxu0 0.0
    %218 = vmatpush1.msra.mxu0 0.0
    %219 = vmatprep.subr.mxu0 0.0
    %220 = vmatpush1.msra.mxu0 0.0
    %221 = vmatprep.subr.mxu0 0.0
    %222 = vmatpush1.msra.mxu0 0.0
    %223 = vmatprep.subr.mxu0 0.0
    %224 = vmatpush1.msra.mxu0 0.0
    %225 = vmatprep.subr.mxu0 0.0
    %226 = vmatpush1.msra.mxu0 0.0
    %227 = vmatprep.subr.mxu0 0.0
    %228 = vmatpush1.msra.mxu0 0.0
    %229 = vmatprep.subr.mxu0 0.0
    %230 = vmatpush1.msra.mxu0 0.0
    %231 = vmatprep.subr.mxu0 0.0
    %232 = vmatpush1.msra.mxu0 0.0
    %233 = vmatprep.subr.mxu0 0.0
    %234 = vmatpush1.msra.mxu0 0.0
    %235 = vmatprep.mubr.f32.mxu0 0.0
    %236 = vmatmul.mubr.f32.gmra.mrb[0].mxu0 %v151
    %v237 = vpop.f32.mrb[0].mxu0
    %v238 = vadd.f32 %v170, %v237
    %v239 = vpop.f32.mrb[0].mxu0
    %240 = vdwg.mxu0
    %v241 = vmul.f32 %v55, %v238
    %v242 = vlaneseq
    %v243 = vshrl.u32 %v242, 7
    %v244 = vsub.s32 1, %v243
    %v245 = vrot.slane %v56, %v244
    %v246 = vadd.f32 %v241, %v245
    %v247 = vadd.f32 %v246, %v151
    %s248 = scalar_lea.vmem [#allocation7], 256
    %v249 = vld [vmem:[%s248] sm:$0xff]
    %v250 = vld [vmem:[%s248 + $0x8] sm:$0xff]
    %v251 = vld [vmem:[%s248 + $0x10] sm:$0xff]
    %v252 = vld [vmem:[%s248 + $0x18] sm:$0xff]
    %v253 = vld [vmem:[%s248 + $0x20] sm:$0xff]
    %v254 = vld [vmem:[%s248 + $0x28] sm:$0xff]
    %v255 = vld [vmem:[%s248 + $0x30] sm:$0xff]
    %v256 = vld [vmem:[%s248 + $0x38] sm:$0xff]
    %v257 = vld [vmem:[%s248 + $0x40] sm:$0xff]
    %v258 = vld [vmem:[%s248 + $0x48] sm:$0xff]
    %v259 = vld [vmem:[%s248 + $0x50] sm:$0xff]
    %v260 = vld [vmem:[%s248 + $0x58] sm:$0xff]
    %v261 = vld [vmem:[%s248 + $0x60] sm:$0xff]
    %v262 = vld [vmem:[%s248 + $0x68] sm:$0xff]
    %v263 = vld [vmem:[%s248 + $0x70] sm:$0xff]
    %v264 = vld [vmem:[%s248 + $0x78] sm:$0xff]
    %s265 = sld [smem:[#allocation2 + $0x2]]
    %v266 = vstv %s265
    %267 = vmatprep.subr.mxu0 0.0
    %268 = vmatpush1.msra.mxu0 %v249
    %269 = vmatprep.subr.mxu0 0.0
    %270 = vmatpush1.msra.mxu0 %v250
    %271 = vmatprep.subr.mxu0 0.0
    %272 = vmatpush1.msra.mxu0 %v251
    %273 = vmatprep.subr.mxu0 0.0
    %274 = vmatpush1.msra.mxu0 %v252
    %275 = vmatprep.subr.mxu0 0.0
    %276 = vmatpush1.msra.mxu0 %v253
    %277 = vmatprep.subr.mxu0 0.0
    %278 = vmatpush1.msra.mxu0 %v254
    %279 = vmatprep.subr.mxu0 0.0
    %280 = vmatpush1.msra.mxu0 %v255
    %281 = vmatprep.subr.mxu0 0.0
    %282 = vmatpush1.msra.mxu0 %v256
    %283 = vmatprep.subr.mxu0 0.0
    %284 = vmatpush1.msra.mxu0 %v257
    %285 = vmatprep.subr.mxu0 0.0
    %286 = vmatpush1.msra.mxu0 %v258
    %287 = vmatprep.subr.mxu0 0.0
    %288 = vmatpush1.msra.mxu0 %v259
    %289 = vmatprep.subr.mxu0 0.0
    %290 = vmatpush1.msra.mxu0 %v260
    %291 = vmatprep.subr.mxu0 0.0
    %292 = vmatpush1.msra.mxu0 %v261
    %293 = vmatprep.subr.mxu0 0.0
    %294 = vmatpush1.msra.mxu0 %v262
    %295 = vmatprep.subr.mxu0 0.0
    %296 = vmatpush1.msra.mxu0 %v263
    %297 = vmatprep.subr.mxu0 0.0
    %298 = vmatpush1.msra.mxu0 %v264
    %299 = vmatprep.subr.mxu0 0.0
    %300 = vmatpush1.msra.mxu0 0.0
    %301 = vmatprep.subr.mxu0 0.0
    %302 = vmatpush1.msra.mxu0 0.0
    %303 = vmatprep.subr.mxu0 0.0
    %304 = vmatpush1.msra.mxu0 0.0
    %305 = vmatprep.subr.mxu0 0.0
    %306 = vmatpush1.msra.mxu0 0.0
    %307 = vmatprep.subr.mxu0 0.0
    %308 = vmatpush1.msra.mxu0 0.0
    %309 = vmatprep.subr.mxu0 0.0
    %310 = vmatpush1.msra.mxu0 0.0
    %311 = vmatprep.subr.mxu0 0.0
    %312 = vmatpush1.msra.mxu0 0.0
    %313 = vmatprep.subr.mxu0 0.0
    %314 = vmatpush1.msra.mxu0 0.0
    %315 = vmatprep.subr.mxu0 0.0
    %316 = vmatpush1.msra.mxu0 0.0
    %317 = vmatprep.subr.mxu0 0.0
    %318 = vmatpush1.msra.mxu0 0.0
    %319 = vmatprep.subr.mxu0 0.0
    %320 = vmatpush1.msra.mxu0 0.0
    %321 = vmatprep.subr.mxu0 0.0
    %322 = vmatpush1.msra.mxu0 0.0
    %323 = vmatprep.subr.mxu0 0.0
    %324 = vmatpush1.msra.mxu0 0.0
    %325 = vmatprep.subr.mxu0 0.0
    %326 = vmatpush1.msra.mxu0 0.0
    %327 = vmatprep.subr.mxu0 0.0
    %328 = vmatpush1.msra.mxu0 0.0
    %329 = vmatprep.subr.mxu0 0.0
    %330 = vmatpush1.msra.mxu0 0.0
    %331 = vmatprep.mubr.f32.mxu0 0.0
    %332 = vmatmul.mubr.f32.gmra.mrb[0].mxu0 %v247
    %v333 = vpop.f32.mrb[0].mxu0
    %v334 = vadd.f32 %v266, %v333
    %v335 = vpop.f32.mrb[0].mxu0
    %336 = vdwg.mxu0
    %v337 = vmul.f32 %v55, %v334
    %v338 = vlaneseq
    %v339 = vshrl.u32 %v338, 7
    %v340 = vsub.s32 2, %v339
    %v341 = vrot.slane %v56, %v340
    %v342 = vadd.f32 %v337, %v341
    %v343 = vadd.f32 %v342, %v247
    %344 = vst [vmem:[#allocation9] sm:$0xff] %v343
    // Predicated region
    $region30: #{tpu_custom_call.1} parent=1 // pred_check
      _
    $region31: #{tpu_custom_call.1} parent=1 // pred_check_branch
      %346 = sbr.rel (0) target = $region33
    $region32: #{tpu_custom_call.1} parent=1 // pred_region
      %s348 = ssub.s32 128, 128
      %349 = vsyncadd [#allocation4], %s348
      %s351 = sshll.u32 [#allocation9], 4
      %s352 = int_to_ptr.vmem [resolvable:$true] %s351
      %354 = dma.vmem_to_hbm [thread:$0]  %s352, 128, %s4, [#allocation4]
    $region33: #{tpu_custom_call.1} parent=1 // pred_fallthru
      _
    // Predicated region
    $region34: #{tpu_custom_call.1} parent=1 // pred_check
      _
    $region35: #{tpu_custom_call.1} parent=1 // pred_check_branch
      %356 = sbr.rel (0) target = $region37
    $region36: #{tpu_custom_call.1} parent=1 // pred_region
      %357 = dma.done [#allocation4], 128
    $region37: #{tpu_custom_call.1} parent=1 // pred_fallthru
      _
    %358 = vsyncpa [#allocation3], 1
    %359 = vsyncpa [#allocation8], 1
    %360 = vsyncpa [#allocation4], 1
    %361 = vsyncpa [#allocation5], 1

</llo_original>
